<compile_context>
chip_gen: v5e
topology: v5e:2x2
jax: 0.10.0
libtpu: 0.0.40
codegen_flags: <defaults>
</compile_context>

<pallas_src>
import functools
import math

import jax
import jax.numpy as jnp
from jax.experimental import pallas as pl
from jax.experimental.pallas import tpu as pltpu


def _cross_attn_kernel(x_ref, kbd_ref, vbd_ref, wq_ref, wo_ref, ssum_ref,
                       bo_ref, o_ref, *, scale, approx_recip, compute_dtype):
    """Fused multi-head cross-attention for one (batch, query-tile) grid cell.

    x_ref    : (1, C, TQ)  query tile, channel-major (input dtype)
    kbd_ref  : (1, C, L)   block-diagonal K, L = heads * M  (compute dtype)
    vbd_ref  : (1, L, C)   block-diagonal V                 (compute dtype)
    wq_ref   : (C, C)      Wq^T                             (compute dtype)
    wo_ref   : (C, C)      Wo^T                             (compute dtype)
    ssum_ref : (L, L)      block-diagonal ones (segmented softmax sum), f32
    bo_ref   : (1, C)      to_out bias, f32
    o_ref    : (1, C, TQ)  output tile, channel-major (output dtype)
    """
    cdt = compute_dtype

    # Channel-major -> token-major in VMEM (XLU transpose, overlapped with the
    # MXU); replaces the former HBM-level NCHW -> [B, N, C] transpose.
    x_tok = jnp.transpose(x_ref[0]).astype(cdt)                       # [TQ, C]

    # (1) Q projection: one full-width MXU matmul, f32 accumulation.
    q_all = jnp.dot(x_tok, wq_ref[...],
                    preferred_element_type=jnp.float32).astype(cdt)   # [TQ, C]

    # (2) Scores for ALL heads at once via the block-diagonal K operand.
    sim = jnp.dot(q_all, kbd_ref[0],
                  preferred_element_type=jnp.float32) * scale         # [TQ, L]

    # (3) Softmax batched across heads on the lane-dense [TQ, heads*M] layout.
    #     Softmax is shift-invariant per (row, head); subtracting the per-row
    #     max across all heads is exact in real arithmetic and numerically
    #     safe unless the logit spread across heads exceeds ~80 (f32 exp
    #     range).  The per-head denominators come back broadcast across each
    #     head's M lanes via one MXU matmul with a block-diagonal ones matrix.
    sim = sim - jnp.max(sim, axis=-1, keepdims=True)
    p = jnp.exp(sim)                                                   # [TQ, L]
    denom = jnp.dot(p, ssum_ref[...], preferred_element_type=jnp.float32)
    denom = jnp.maximum(denom, 1e-30)       # guard against total underflow
    attn = (p * pl.reciprocal(denom, approx=approx_recip)).astype(cdt)

    # (4) Attention-weighted values: block-diagonal V yields the heads already
    #     concatenated ("b h n d -> b n (h d)" is free), then ONE full-width
    #     to_out matmul + bias.
    out_all = jnp.dot(attn, vbd_ref[0],
                      preferred_element_type=jnp.float32).astype(cdt)  # [TQ, C]
    y = jnp.dot(out_all, wo_ref[...],
                preferred_element_type=jnp.float32) + bo_ref[...]      # [TQ, C]

    # Back to channel-major for a lane-dense store into the NCHW output.
    o_ref[0] = jnp.transpose(y).astype(o_ref.dtype)                    # [C, TQ]


def _pick_query_tile(n, want):
    """Largest multiple of 128 that divides n and is <= want (else n itself)."""
    want = max(128, min(want, n))
    for t in range(want - want % 128, 127, -128):
        if n % t == 0:
            return t
    return n


def _vmem_limit_bytes(per_step_bytes):
    """Generation-aware VMEM limit: <= half of physical VMEM (v7x: 64 MiB)."""
    try:
        cap = pltpu.get_tpu_info().vmem_capacity_bytes // 2
    except Exception:  # hardware info query unavailable (e.g. interpret mode)
        cap = 32 * 2**20
    return int(min(max(2 * per_step_bytes, 16 * 2**20), cap))


def cross_attention(x, context, params, heads, *, tq=256,
                    compute_dtype=jnp.bfloat16):
    """x: [B, C, H, W] (NCHW), context: [B, M, context_dim] -> [B, C, H, W]."""
    B, C, H, W = x.shape
    _, M, Cd = context.shape
    N = H * W
    assert C % heads == 0, "dim must be divisible by heads"
    d = C // heads
    L = heads * M
    scale = d ** (-0.5)
    tq = _pick_query_tile(N, tq)
    cdt = jnp.dtype(compute_dtype)

    # NCHW -> [B, C, N] is a pure reshape (no HBM transpose); the kernel
    # transposes each tile to token-major in VMEM.
    x_cn = x.reshape(B, C, N)

    # K/V projections hoisted out of the query-tile grid (once per call on the
    # tiny context instead of once per tile), then laid out block-diagonally:
    #   k_bd[b, h*d + dd, h*M + m] = (context @ Wk^T)[b, m, h*d + dd]
    #   v_bd[b, h*M + m, h*d + dd] = (context @ Wv^T)[b, m, h*d + dd]
    k = jnp.einsum("bmc,kc->bmk", context, params["wk"])          # [B, M, C]
    v = jnp.einsum("bmc,kc->bmk", context, params["wv"])          # [B, M, C]
    eye_h = jnp.eye(heads, dtype=k.dtype)
    k4 = k.reshape(B, M, heads, d)
    v4 = v.reshape(B, M, heads, d)
    k_bd = jnp.einsum("bmhd,hg->bhdgm", k4, eye_h).reshape(B, C, L).astype(cdt)
    v_bd = jnp.einsum("bmhd,hg->bhmgd", v4, eye_h).reshape(B, L, C).astype(cdt)

    wq_t = params["wq"].T.astype(cdt)                             # [C, C]
    wo_t = params["wo"].T.astype(cdt)                             # [C, C]
    bo = params["bo"].reshape(1, C).astype(jnp.float32)
    # Block-diagonal ones matrix used for the segmented softmax sum on the MXU.
    s_sum = jnp.kron(jnp.eye(heads, dtype=jnp.float32),
                     jnp.ones((M, M), jnp.float32))               # [L, L]

    in_sz = jnp.dtype(x.dtype).itemsize
    c_sz = cdt.itemsize
    per_step = (2 * C * tq * in_sz                 # x tile (double-buffered)
                + 2 * C * tq * in_sz               # output tile
                + 2 * (C * L + L * C) * c_sz       # block-diag K / V
                + 2 * 2 * C * C * c_sz             # Wq^T, Wo^T
                + 2 * (L * L + C) * 4              # softmax-sum matrix, bias
                + 4 * tq * (C + L) * 4)            # f32 intermediates
    vmem_limit = _vmem_limit_bytes(per_step)

    kernel = functools.partial(
        _cross_attn_kernel, scale=scale,
        approx_recip=(cdt != jnp.dtype(jnp.float32)),
        compute_dtype=cdt)

    grid_spec = pltpu.PrefetchScalarGridSpec(
        num_scalar_prefetch=0,
        grid=(B, N // tq),
        in_specs=[
            pl.BlockSpec((1, C, tq), lambda b, t: (b, 0, t)),     # x (channel-major)
            pl.BlockSpec((1, C, L), lambda b, t: (b, 0, 0)),      # block-diag K
            pl.BlockSpec((1, L, C), lambda b, t: (b, 0, 0)),      # block-diag V
            pl.BlockSpec((C, C), lambda b, t: (0, 0)),            # Wq^T
            pl.BlockSpec((C, C), lambda b, t: (0, 0)),            # Wo^T
            pl.BlockSpec((L, L), lambda b, t: (0, 0)),            # softmax-sum ones
            pl.BlockSpec((1, C), lambda b, t: (0, 0)),            # to_out bias
        ],
        out_specs=pl.BlockSpec((1, C, tq), lambda b, t: (b, 0, t)),
    )

    out_cn = pl.pallas_call(
        kernel,
        out_shape=jax.ShapeDtypeStruct((B, C, N), x.dtype),
        grid_spec=grid_spec,
        compiler_params=pltpu.CompilerParams(
            dimension_semantics=("parallel", "parallel"),
            vmem_limit_bytes=vmem_limit,
        ),
    )(x_cn, k_bd, v_bd, wq_t, wo_t, s_sum, bo)

    return out_cn.reshape(B, C, H, W)


def reference_cross_attention(x, context, params, heads):
    """Pure-JAX reference matching the PyTorch forward (correctness check)."""
    B, C, H, W = x.shape
    N = H * W
    scale = (C // heads) ** (-0.5)
    xs = jnp.transpose(x, (0, 2, 3, 1)).reshape(B, N, C)
    q = xs @ params["wq"].T
    k = context @ params["wk"].T
    v = context @ params["wv"].T

    def split(t):
        b, n, c = t.shape
        return jnp.transpose(t.reshape(b, n, heads, c // heads), (0, 2, 1, 3))

    q, k, v = split(q), split(k), split(v)
    sim = jnp.einsum("bhid,bhjd->bhij", q, k) * scale
    attn = jax.nn.softmax(sim, axis=-1)
    out = jnp.einsum("bhij,bhjd->bhid", attn, v)
    out = jnp.transpose(out, (0, 2, 1, 3)).reshape(B, N, C)
    out = out @ params["wo"].T + params["bo"]
    return jnp.transpose(out.reshape(B, H, W, C), (0, 3, 1, 2))


if __name__ == "__main__":
    # dim=128, heads=8 (head_dim=16), 16x16 feature map, context: 8 tokens x 64.
    # C=128 keeps every kernel operand/output lane-dense.
    B, C, H, W = 2, 128, 16, 16
    M, Cd = 8, 64
    heads = 8

    key = jax.random.PRNGKey(0)
    kx, kc, k1, k2, k3, k4, k5 = jax.random.split(key, 7)
    x = jax.random.normal(kx, (B, C, H, W), dtype=jnp.float32)
    context = jax.random.normal(kc, (B, M, Cd), dtype=jnp.float32)

    # Deterministic synthetic parameters (PyTorch Linear convention [out, in]).
    def init_w(k, out_f, in_f):
        bound = 1.0 / math.sqrt(in_f)
        return jax.random.uniform(k, (out_f, in_f), jnp.float32, -bound, bound)

    params = {
        "wq": init_w(k1, C, C),
        "wk": init_w(k2, C, Cd),
        "wv": init_w(k3, C, Cd),
        "wo": init_w(k4, C, C),
        "bo": jax.random.uniform(k5, (C,), jnp.float32,
                                 -1.0 / math.sqrt(C), 1.0 / math.sqrt(C)),
    }

    ref = reference_cross_attention(x, context, params, heads)

    # Exact-math path (f32 compute, exact reciprocal) -- tight structural check.
    out_f32 = jax.block_until_ready(
        cross_attention(x, context, params, heads, tq=128,
                        compute_dtype=jnp.float32))
    assert out_f32.shape == (B, C, H, W)
    assert float(jnp.max(jnp.abs(out_f32 - ref))) < 5e-3, "f32 kernel mismatch"

    # Fast path (bf16 into the MXU, f32 accumulation) -- looser tolerance.
    out_bf16 = jax.block_until_ready(
        cross_attention(x, context, params, heads))
    assert out_bf16.shape == (B, C, H, W)
    assert float(jnp.max(jnp.abs(out_bf16 - ref))) < 5e-2, "bf16 kernel mismatch"

    print("KERNEL_OK")
</pallas_src>

<mosaic_0001>
module attributes {stable_mosaic.version = 11 : i64} {
  func.func @_cross_attn_kernel(%arg0: i32, %arg1: i32, %arg2: memref<1x128x128xf32, #tpu.memory_space<vmem>>, %arg3: memref<1x128x64xf32, #tpu.memory_space<vmem>>, %arg4: memref<1x64x128xf32, #tpu.memory_space<vmem>>, %arg5: memref<128x128xf32, #tpu.memory_space<vmem>>, %arg6: memref<128x128xf32, #tpu.memory_space<vmem>>, %arg7: memref<64x64xf32, #tpu.memory_space<vmem>>, %arg8: memref<1x128xf32, #tpu.memory_space<vmem>>, %arg9: memref<1x128x128xf32, #tpu.memory_space<vmem>>) attributes {dimension_semantics = [#tpu.dimension_semantics<parallel>, #tpu.dimension_semantics<parallel>], iteration_bounds = array<i64: 2, 2>, scalar_prefetch = 0 : i64, scratch_operands = 0 : i64, tpu.core_type = #tpu.core_type<tc>, window_params = [{transform_indices = @transform_0, window_bounds = array<i64: 1, 128, 128>}, {transform_indices = @transform_1, window_bounds = array<i64: 1, 128, 64>}, {transform_indices = @transform_2, window_bounds = array<i64: 1, 64, 128>}, {pipeline_mode = #tpu.pipeline_mode<synchronous>, transform_indices = @transform_3, window_bounds = array<i64: 128, 128>}, {pipeline_mode = #tpu.pipeline_mode<synchronous>, transform_indices = @transform_4, window_bounds = array<i64: 128, 128>}, {pipeline_mode = #tpu.pipeline_mode<synchronous>, transform_indices = @transform_5, window_bounds = array<i64: 64, 64>}, {pipeline_mode = #tpu.pipeline_mode<synchronous>, transform_indices = @transform_6, window_bounds = array<i64: 1, 128>}, {transform_indices = @transform_7, window_bounds = array<i64: 1, 128, 128>}]} {
    %c0 = arith.constant 0 : index
    %c0_0 = arith.constant 0 : index
    %c0_1 = arith.constant 0 : index
    %0 = vector.load %arg2[%c0, %c0_0, %c0_1] : memref<1x128x128xf32, #tpu.memory_space<vmem>>, vector<1x128x128xf32>
    %1 = vector.shape_cast %0 : vector<1x128x128xf32> to vector<128x128xf32>
    %2 = tpu.transpose %1, [1, 0] : vector<128x128xf32> -> vector<128x128xf32>
    %c0_2 = arith.constant 0 : index
    %c0_3 = arith.constant 0 : index
    %3 = vector.load %arg5[%c0_2, %c0_3] : memref<128x128xf32, #tpu.memory_space<vmem>>, vector<128x128xf32>
    %cst = arith.constant dense<0.000000e+00> : vector<128x128xf32>
    %4 = tpu.matmul %2, %3, %cst {dimension_numbers = #tpu.dot_dimension_numbers<[1], [0], [0], [1], [0, 0, 1, 1], [], []>} : vector<128x128xf32>, vector<128x128xf32>, vector<128x128xf32> -> vector<128x128xf32>
    %c0_4 = arith.constant 0 : index
    %c0_5 = arith.constant 0 : index
    %c0_6 = arith.constant 0 : index
    %5 = vector.load %arg3[%c0_4, %c0_5, %c0_6] : memref<1x128x64xf32, #tpu.memory_space<vmem>>, vector<1x128x64xf32>
    %6 = vector.shape_cast %5 : vector<1x128x64xf32> to vector<128x64xf32>
    %cst_7 = arith.constant dense<0.000000e+00> : vector<128x64xf32>
    %7 = tpu.matmul %4, %6, %cst_7 {dimension_numbers = #tpu.dot_dimension_numbers<[1], [0], [0], [1], [0, 0, 1, 1], [], []>} : vector<128x128xf32>, vector<128x64xf32>, vector<128x64xf32> -> vector<128x64xf32>
    %cst_8 = arith.constant 2.500000e-01 : f32
    %8 = vector.broadcast %cst_8 : f32 to vector<128x64xf32>
    %9 = arith.mulf %7, %8 : vector<128x64xf32>
    %cst_9 = arith.constant dense<0xFF800000> : vector<128xf32>
    %10 = vector.multi_reduction <maximumf>, %9, %cst_9 [1] : vector<128x64xf32> to vector<128xf32>
    %11 = vector.shape_cast %10 : vector<128xf32> to vector<128x1xf32>
    %12 = vector.broadcast %11 : vector<128x1xf32> to vector<128x64xf32>
    %13 = arith.subf %9, %12 : vector<128x64xf32>
    %14 = math.exp %13 : vector<128x64xf32>
    %c0_10 = arith.constant 0 : index
    %c0_11 = arith.constant 0 : index
    %15 = vector.load %arg7[%c0_10, %c0_11] : memref<64x64xf32, #tpu.memory_space<vmem>>, vector<64x64xf32>
    %cst_12 = arith.constant dense<0.000000e+00> : vector<128x64xf32>
    %16 = tpu.matmul %14, %15, %cst_12 {dimension_numbers = #tpu.dot_dimension_numbers<[1], [0], [0], [1], [0, 0, 1, 1], [], []>} : vector<128x64xf32>, vector<64x64xf32>, vector<128x64xf32> -> vector<128x64xf32>
    %cst_13 = arith.constant 1.000000e-30 : f32
    %17 = vector.broadcast %cst_13 : f32 to vector<128x64xf32>
    %18 = arith.maximumf %16, %17 : vector<128x64xf32>
    %19 = tpu.reciprocal %18 : vector<128x64xf32> -> vector<128x64xf32>
    %20 = arith.mulf %14, %19 : vector<128x64xf32>
    %c0_14 = arith.constant 0 : index
    %c0_15 = arith.constant 0 : index
    %c0_16 = arith.constant 0 : index
    %21 = vector.load %arg4[%c0_14, %c0_15, %c0_16] : memref<1x64x128xf32, #tpu.memory_space<vmem>>, vector<1x64x128xf32>
    %22 = vector.shape_cast %21 : vector<1x64x128xf32> to vector<64x128xf32>
    %cst_17 = arith.constant dense<0.000000e+00> : vector<128x128xf32>
    %23 = tpu.matmul %20, %22, %cst_17 {dimension_numbers = #tpu.dot_dimension_numbers<[1], [0], [0], [1], [0, 0, 1, 1], [], []>} : vector<128x64xf32>, vector<64x128xf32>, vector<128x128xf32> -> vector<128x128xf32>
    %c0_18 = arith.constant 0 : index
    %c0_19 = arith.constant 0 : index
    %24 = vector.load %arg6[%c0_18, %c0_19] : memref<128x128xf32, #tpu.memory_space<vmem>>, vector<128x128xf32>
    %cst_20 = arith.constant dense<0.000000e+00> : vector<128x128xf32>
    %25 = tpu.matmul %23, %24, %cst_20 {dimension_numbers = #tpu.dot_dimension_numbers<[1], [0], [0], [1], [0, 0, 1, 1], [], []>} : vector<128x128xf32>, vector<128x128xf32>, vector<128x128xf32> -> vector<128x128xf32>
    %c0_21 = arith.constant 0 : index
    %c0_22 = arith.constant 0 : index
    %26 = vector.load %arg8[%c0_21, %c0_22] : memref<1x128xf32, #tpu.memory_space<vmem>>, vector<1x128xf32>
    %27 = vector.broadcast %26 : vector<1x128xf32> to vector<128x128xf32>
    %28 = arith.addf %25, %27 : vector<128x128xf32>
    %29 = tpu.transpose %28, [1, 0] : vector<128x128xf32> -> vector<128x128xf32>
    %c0_23 = arith.constant 0 : index
    %c0_24 = arith.constant 0 : index
    %c0_25 = arith.constant 0 : index
    %30 = vector.load %arg9[%c0_23, %c0_24, %c0_25] : memref<1x128x128xf32, #tpu.memory_space<vmem>>, vector<1x128x128xf32>
    %31 = vector.shape_cast %30 : vector<1x128x128xf32> to vector<128x128xf32>
    %32 = vector.shape_cast %29 : vector<128x128xf32> to vector<1x128x128xf32>
    tpu.vector_store %arg9[%c0_23, %c0_24, %c0_25], %32 {strides = array<i32>} : memref<1x128x128xf32, #tpu.memory_space<vmem>>, vector<1x128x128xf32>,
    return
  }
  func.func @transform_0(%arg0: i32, %arg1: i32) -> (i32, i32, i32) {
    %c0_i32 = arith.constant 0 : i32
    %c0_i32_0 = arith.constant 0 : i32
    return %arg0, %c0_i32, %arg1 : i32, i32, i32
  }
  func.func @transform_1(%arg0: i32, %arg1: i32) -> (i32, i32, i32) {
    %c0_i32 = arith.constant 0 : i32
    %c0_i32_0 = arith.constant 0 : i32
    %c0_i32_1 = arith.constant 0 : i32
    return %arg0, %c0_i32, %c0_i32_0 : i32, i32, i32
  }
  func.func @transform_2(%arg0: i32, %arg1: i32) -> (i32, i32, i32) {
    %c0_i32 = arith.constant 0 : i32
    %c0_i32_0 = arith.constant 0 : i32
    %c0_i32_1 = arith.constant 0 : i32
    return %arg0, %c0_i32, %c0_i32_0 : i32, i32, i32
  }
  func.func @transform_3(%arg0: i32, %arg1: i32) -> (i32, i32) {
    %c0_i32 = arith.constant 0 : i32
    %c0_i32_0 = arith.constant 0 : i32
    %c0_i32_1 = arith.constant 0 : i32
    return %c0_i32, %c0_i32_0 : i32, i32
  }
  func.func @transform_4(%arg0: i32, %arg1: i32) -> (i32, i32) {
    %c0_i32 = arith.constant 0 : i32
    %c0_i32_0 = arith.constant 0 : i32
    %c0_i32_1 = arith.constant 0 : i32
    return %c0_i32, %c0_i32_0 : i32, i32
  }
  func.func @transform_5(%arg0: i32, %arg1: i32) -> (i32, i32) {
    %c0_i32 = arith.constant 0 : i32
    %c0_i32_0 = arith.constant 0 : i32
    %c0_i32_1 = arith.constant 0 : i32
    return %c0_i32, %c0_i32_0 : i32, i32
  }
  func.func @transform_6(%arg0: i32, %arg1: i32) -> (i32, i32) {
    %c0_i32 = arith.constant 0 : i32
    %c0_i32_0 = arith.constant 0 : i32
    %c0_i32_1 = arith.constant 0 : i32
    return %c0_i32, %c0_i32_0 : i32, i32
  }
  func.func @transform_7(%arg0: i32, %arg1: i32) -> (i32, i32, i32) {
    %c0_i32 = arith.constant 0 : i32
    %c0_i32_0 = arith.constant 0 : i32
    return %arg0, %c0_i32, %arg1 : i32, i32, i32
  }
}

</mosaic_0001>

<llo_original>
// kernel: tpu_custom_call.1
$region0: #{tpu_custom_call.1}
  #allocation0 [shape = 'u32[]', space=smem, size = 0x4, offset = 0x4, fixed_abs, tag = 'smem constant byte address 0x4 - core index']
  #allocation1 [shape = 'u32[72,128]{1,0:T(1,128)}', space=vmem, size = 0x9000, scoped, tag = 'internal scratch']
  %s0 = inlined_call_operand.hbm [shape: f32[2,128,256], index: 0, kind: input, shape index: {}]
  %s1 = inlined_call_operand.vmem [shape: f32[2,128,64], index: 1, kind: input, shape index: {}]
  %s2 = inlined_call_operand.vmem [shape: f32[2,64,128], index: 2, kind: input, shape index: {}]
  %s3 = inlined_call_operand.vmem [shape: f32[128,128], index: 3, kind: input, shape index: {}]
  %s4 = inlined_call_operand.vmem [shape: f32[128,128], index: 4, kind: input, shape index: {}]
  %s5 = inlined_call_operand.hbm [shape: f32[64,64], index: 5, kind: input, shape index: {}]
  %s6 = inlined_call_operand.vmem [shape: f32[1,128], index: 6, kind: input, shape index: {}]
  %s7 = inlined_call_operand.hbm [shape: f32[2,128,256], index: 7, kind: output, shape index: {}]
  %s8 = sld [smem:[#allocation0]]
  $region69: #{tpu_custom_call.1} parent=0
    _
  %s10 = ssub.s32 1, %s8
  %s11 = scalar_select 0, %s10, %s8
  $region1: #{tpu_custom_call.1} parent=0
    #allocation2 [shape = 'u8[131072]{0}', space=vmem, size = 0x20000, scoped, tag = 'input window, operand 0']
    #allocation3 [shape = 's32[2]{0}', space=sflag, size = 0x8, scoped, tag = 'scoped memory for tpu_custom_call.1']
    #allocation4 [shape = 's32[2]{0}', space=sflag, size = 0x8, scoped, tag = 'scoped memory for tpu_custom_call.1']
    #allocation5 [shape = 'u8[32768]{0}', space=vmem, size = 0x8000, scoped, tag = 'input window, operand 5, single buffered']
    #allocation6 [shape = 's32[1]{0}', space=sflag, size = 0x4, scoped, tag = 'scoped memory for tpu_custom_call.1']
    #allocation7 [shape = 'u8[131072]{0}', space=vmem, size = 0x20000, scoped, tag = 'output window, operand 0']
    %12 = vsyncpa [#allocation3], 0
    %s13 = scalar_lea.sflag [#allocation3], 1
    %14 = vsyncpa %s13, 0
    %15 = vsyncpa [#allocation6], 0
    %16 = vsyncpa [#allocation4], 0
    %s17 = scalar_lea.sflag [#allocation4], 1
    %18 = vsyncpa %s17, 0
    loop: start=0, step=1, limit=6
    $region2: #{tpu_custom_call.1} parent=1 // loop_pre_header
      _
    $region3: #{tpu_custom_call.1} parent=1 // loop_header
      %s20 = sphi 0, %s24
      %p21 = scmp.ge.s32.totalorder %s20, 6
      %s27 = sphi 0, %s39
      %s28 = sphi 0, %s35
      %s29 = sphi 0, %s27
      %s30 = sphi 0, %s28
      %s31 = sphi 0, %s29
      %s32 = sphi 0, %s30
      %s44 = sphi 0, %s46
      %s47 = sphi 0, %s44
      %s48 = sphi 0, %s47
      %s64 = sphi 0, %s48
      %s70 = sphi 0, %s72
      %s73 = sphi 0, %s70
      %s74 = sphi 0, %s73
      %s90 = sphi 0, %s74
      %s96 = sphi 0, %s98
      %s99 = sphi 0, %s96
      %s100 = sphi 0, %s99
      %s116 = sphi 0, %s100
      %s120 = sphi 0, %s120
      %s122 = sphi 0, %s120
      %s123 = sphi 0, %s122
      %s137 = sphi 0, %s123
      %s141 = sphi 0, %s141
      %s143 = sphi 0, %s141
      %s144 = sphi 0, %s143
      %s158 = sphi 0, %s144
      %s162 = sphi 0, %s162
      %s164 = sphi 0, %s162
      %s165 = sphi 0, %s164
      %s179 = sphi 0, %s165
      %s183 = sphi 0, %s183
      %s185 = sphi 0, %s183
      %s186 = sphi 0, %s185
      %s200 = sphi 0, %s186
      %s208 = sphi 0, %s210
      %s211 = sphi 0, %s208
      %s212 = sphi 0, %s211
      %s228 = sphi 0, %s212
    $region4: #{tpu_custom_call.1} parent=1 // loop_header_branch
      %23 = sbr.rel (%p21) target = $region8
    $region5: #{tpu_custom_call.1} parent=1 // loop_body
      %s25 = ssub.s32 %s20, 1
      %s26 = ssub.s32 %s20, 2
      %s33 = sadd.s32 1, %s28
      %p34 = scmp.ge.s32.totalorder %s33, 2
      %s35 = scalar_select %p34, 0, %s33
      %s36 = sadd.s32 1, %s27
      %s37 = scalar_select %p34, %s36, %s27
      %p38 = scmp.ge.s32.totalorder %s37, 2
      %s39 = scalar_select %p38, 0, %s37
      %s40 = ssub.s32 %s27, %s39
      %s41 = ssub.s32 %s28, %s35
      %s42 = sor.u32 %s40, %s41
      %p43 = scmp.eq.s32.totalorder %s42, 0
      %s45 = sadd.s32 %s44, 1
      %s46 = scalar_select %p43, %s44, %s45
      %p49 = pneg %p43
      %p50 = scmp.eq.s32.totalorder %s20, 3
      %p51 = por %p49, %p50
      %p52 = scmp.ne.s32.totalorder %s44, %s47
      %p53 = scmp.eq.s32.totalorder %s20, 0
      %p54 = por %p52, %p53
      %p55 = scmp.ne.s32.totalorder %s44, %s47
      %p56 = scmp.eq.s32.totalorder %s25, 3
      %p57 = por %p55, %p56
      %p58 = scmp.ne.s32.totalorder %s47, %s48
      %p59 = scmp.eq.s32.totalorder %s25, 0
      %p60 = por %p58, %p59
      %p61 = scmp.ne.s32.totalorder %s47, %s48
      %p62 = scmp.eq.s32.totalorder %s26, 3
      %p63 = por %p61, %p62
      %p65 = scmp.ne.s32.totalorder %s48, %s64
      %p66 = scmp.eq.s32.totalorder %s26, 0
      %p67 = por %p65, %p66
      %s68 = ssub.s32 %s27, %s39
      %p69 = scmp.eq.s32.totalorder %s68, 0
      %s71 = sadd.s32 %s70, 1
      %s72 = scalar_select %p69, %s70, %s71
      %p75 = pneg %p69
      %p76 = scmp.eq.s32.totalorder %s20, 3
      %p77 = por %p75, %p76
      %p78 = scmp.ne.s32.totalorder %s70, %s73
      %p79 = scmp.eq.s32.totalorder %s20, 0
      %p80 = por %p78, %p79
      %p81 = scmp.ne.s32.totalorder %s70, %s73
      %p82 = scmp.eq.s32.totalorder %s25, 3
      %p83 = por %p81, %p82
      %p84 = scmp.ne.s32.totalorder %s73, %s74
      %p85 = scmp.eq.s32.totalorder %s25, 0
      %p86 = por %p84, %p85
      %p87 = scmp.ne.s32.totalorder %s73, %s74
      %p88 = scmp.eq.s32.totalorder %s26, 3
      %p89 = por %p87, %p88
      %p91 = scmp.ne.s32.totalorder %s74, %s90
      %p92 = scmp.eq.s32.totalorder %s26, 0
      %p93 = por %p91, %p92
      %s94 = ssub.s32 %s27, %s39
      %p95 = scmp.eq.s32.totalorder %s94, 0
      %s97 = sadd.s32 %s96, 1
      %s98 = scalar_select %p95, %s96, %s97
      %p101 = pneg %p95
      %p102 = scmp.eq.s32.totalorder %s20, 3
      %p103 = por %p101, %p102
      %p104 = scmp.ne.s32.totalorder %s96, %s99
      %p105 = scmp.eq.s32.totalorder %s20, 0
      %p106 = por %p104, %p105
      %p107 = scmp.ne.s32.totalorder %s96, %s99
      %p108 = scmp.eq.s32.totalorder %s25, 3
      %p109 = por %p107, %p108
      %p110 = scmp.ne.s32.totalorder %s99, %s100
      %p111 = scmp.eq.s32.totalorder %s25, 0
      %p112 = por %p110, %p111
      %p113 = scmp.ne.s32.totalorder %s99, %s100
      %p114 = scmp.eq.s32.totalorder %s26, 3
      %p115 = por %p113, %p114
      %p117 = scmp.ne.s32.totalorder %s100, %s116
      %p118 = scmp.eq.s32.totalorder %s26, 0
      %p119 = por %p117, %p118
      %s121 = sadd.s32 %s120, 1
      %p124 = scmp.eq.s32.totalorder %s20, 3
      %p125 = scmp.ne.s32.totalorder %s120, %s122
      %p126 = scmp.eq.s32.totalorder %s20, 0
      %p127 = por %p125, %p126
      %p128 = scmp.ne.s32.totalorder %s120, %s122
      %p129 = scmp.eq.s32.totalorder %s25, 3
      %p130 = por %p128, %p129
      %p131 = scmp.ne.s32.totalorder %s122, %s123
      %p132 = scmp.eq.s32.totalorder %s25, 0
      %p133 = por %p131, %p132
      %p134 = scmp.ne.s32.totalorder %s122, %s123
      %p135 = scmp.eq.s32.totalorder %s26, 3
      %p136 = por %p134, %p135
      %p138 = scmp.ne.s32.totalorder %s123, %s137
      %p139 = scmp.eq.s32.totalorder %s26, 0
      %p140 = por %p138, %p139
      %s142 = sadd.s32 %s141, 1
      %p145 = scmp.eq.s32.totalorder %s20, 3
      %p146 = scmp.ne.s32.totalorder %s141, %s143
      %p147 = scmp.eq.s32.totalorder %s20, 0
      %p148 = por %p146, %p147
      %p149 = scmp.ne.s32.totalorder %s141, %s143
      %p150 = scmp.eq.s32.totalorder %s25, 3
      %p151 = por %p149, %p150
      %p152 = scmp.ne.s32.totalorder %s143, %s144
      %p153 = scmp.eq.s32.totalorder %s25, 0
      %p154 = por %p152, %p153
      %p155 = scmp.ne.s32.totalorder %s143, %s144
      %p156 = scmp.eq.s32.totalorder %s26, 3
      %p157 = por %p155, %p156
      %p159 = scmp.ne.s32.totalorder %s144, %s158
      %p160 = scmp.eq.s32.totalorder %s26, 0
      %p161 = por %p159, %p160
      %s163 = sadd.s32 %s162, 1
      %p166 = scmp.eq.s32.totalorder %s20, 3
      %p167 = scmp.ne.s32.totalorder %s162, %s164
      %p168 = scmp.eq.s32.totalorder %s20, 0
      %p169 = por %p167, %p168
      %p170 = scmp.ne.s32.totalorder %s162, %s164
      %p171 = scmp.eq.s32.totalorder %s25, 3
      %p172 = por %p170, %p171
      %p173 = scmp.ne.s32.totalorder %s164, %s165
      %p174 = scmp.eq.s32.totalorder %s25, 0
      %p175 = por %p173, %p174
      %p176 = scmp.ne.s32.totalorder %s164, %s165
      %p177 = scmp.eq.s32.totalorder %s26, 3
      %p178 = por %p176, %p177
      %p180 = scmp.ne.s32.totalorder %s165, %s179
      %p181 = scmp.eq.s32.totalorder %s26, 0
      %p182 = por %p180, %p181
      %s184 = sadd.s32 %s183, 1
      %p187 = scmp.eq.s32.totalorder %s20, 3
      %p188 = scmp.ne.s32.totalorder %s183, %s185
      %p189 = scmp.eq.s32.totalorder %s20, 0
      %p190 = por %p188, %p189
      %p191 = scmp.ne.s32.totalorder %s183, %s185
      %p192 = scmp.eq.s32.totalorder %s25, 3
      %p193 = por %p191, %p192
      %p194 = scmp.ne.s32.totalorder %s185, %s186
      %p195 = scmp.eq.s32.totalorder %s25, 0
      %p196 = por %p194, %p195
      %p197 = scmp.ne.s32.totalorder %s185, %s186
      %p198 = scmp.eq.s32.totalorder %s26, 3
      %p199 = por %p197, %p198
      %p201 = scmp.ne.s32.totalorder %s186, %s200
      %p202 = scmp.eq.s32.totalorder %s26, 0
      %p203 = por %p201, %p202
      %s204 = ssub.s32 %s27, %s39
      %s205 = ssub.s32 %s28, %s35
      %s206 = sor.u32 %s204, %s205
      %p207 = scmp.eq.s32.totalorder %s206, 0
      %s209 = sadd.s32 %s208, 1
      %s210 = scalar_select %p207, %s208, %s209
      %p213 = pneg %p207
      %p214 = scmp.eq.s32.totalorder %s20, 3
      %p215 = por %p213, %p214
      %p216 = scmp.ne.s32.totalorder %s208, %s211
      %p217 = scmp.eq.s32.totalorder %s20, 0
      %p218 = por %p216, %p217
      %p219 = scmp.ne.s32.totalorder %s208, %s211
      %p220 = scmp.eq.s32.totalorder %s25, 3
      %p221 = por %p219, %p220
      %p222 = scmp.ne.s32.totalorder %s211, %s212
      %p223 = scmp.eq.s32.totalorder %s25, 0
      %p224 = por %p222, %p223
      %p225 = scmp.ne.s32.totalorder %s211, %s212
      %p226 = scmp.eq.s32.totalorder %s26, 3
      %p227 = por %p225, %p226
      %p229 = scmp.ne.s32.totalorder %s212, %s228
      %p230 = scmp.eq.s32.totalorder %s26, 0
      %p231 = por %p229, %p230
      %p232 = scmp.le.s32.totalorder 1, %s20
      %p233 = scmp.lt.s32.totalorder %s20, 5
      %p234 = pnand %p232, %p233
      %p235 = pneg %p234
      // Predicated region
      $region9: #{tpu_custom_call.1} parent=5 // pred_check
        _
      $region10: #{tpu_custom_call.1} parent=5 // pred_check_branch
        %237 = sbr.rel (%p234) target = $region12
      $region11: #{tpu_custom_call.1} parent=5 // pred_region
        %s238 = ssub.s32 %s20, 1
        // Predicated region
        $region13: #{tpu_custom_call.1} parent=11 // pred_check
          %p239 = pneg %p133
        $region14: #{tpu_custom_call.1} parent=11 // pred_check_branch
          %241 = sbr.rel (%p239) target = $region16
        $region15: #{tpu_custom_call.1} parent=11 // pred_region
          _
        $region16: #{tpu_custom_call.1} parent=11 // pred_fallthru
          _
        // Predicated region
        $region17: #{tpu_custom_call.1} parent=11 // pred_check
          %p242 = pneg %p154
        $region18: #{tpu_custom_call.1} parent=11 // pred_check_branch
          %244 = sbr.rel (%p242) target = $region20
        $region19: #{tpu_custom_call.1} parent=11 // pred_region
          _
        $region20: #{tpu_custom_call.1} parent=11 // pred_fallthru
          _
        // Predicated region
        $region21: #{tpu_custom_call.1} parent=11 // pred_check
          %p245 = pneg %p175
        $region22: #{tpu_custom_call.1} parent=11 // pred_check_branch
          %247 = sbr.rel (%p245) target = $region24
        $region23: #{tpu_custom_call.1} parent=11 // pred_region
          %249 = vsyncadd [#allocation6], 0
          %s250 = sshll.u32 %s5, 4
          %s251 = int_to_ptr.hbm [resolvable:$true] %s250
          %s252 = sshll.u32 [#allocation5], 4
          %s253 = int_to_ptr.vmem [resolvable:$true] %s252
          %258 = dma.hbm_to_vmem [thread:$0]  %s251, 1024, %s253, [#allocation6], 128, 128, 8
        $region24: #{tpu_custom_call.1} parent=11 // pred_fallthru
          _
        // Predicated region
        $region25: #{tpu_custom_call.1} parent=11 // pred_check
          %p259 = pneg %p196
        $region26: #{tpu_custom_call.1} parent=11 // pred_check_branch
          %261 = sbr.rel (%p259) target = $region28
        $region27: #{tpu_custom_call.1} parent=11 // pred_region
          _
        $region28: #{tpu_custom_call.1} parent=11 // pred_fallthru
          _
      $region12: #{tpu_custom_call.1} parent=5 // pred_fallthru
        _
      %p262 = scmp.lt.s32.totalorder %s20, 4
      // Predicated region
      $region29: #{tpu_custom_call.1} parent=5 // pred_check
        %p263 = pneg %p262
      $region30: #{tpu_custom_call.1} parent=5 // pred_check_branch
        %265 = sbr.rel (%p263) target = $region32
      $region31: #{tpu_custom_call.1} parent=5 // pred_region
        // Predicated region
        $region33: #{tpu_custom_call.1} parent=31 // pred_check
          %p266 = pneg %p54
        $region34: #{tpu_custom_call.1} parent=31 // pred_check_branch
          %268 = sbr.rel (%p266) target = $region36
        $region35: #{tpu_custom_call.1} parent=31 // pred_region
          %s269 = sand.u32 %s44, 1
          %s270 = scalar_lea.sflag [#allocation3], %s269
          %s271 = sand.u32 %s44, 1
          %s272 = smul.addr %s271, 128
          %s273 = scalar_lea.vmem [#allocation2], %s272
          %275 = vsyncadd %s270, 0
          %s276 = smul.addr %s27, 32
          %s277 = sadd.s32 %s28, %s276
          %s278 = smul.addr %s277, 8
          %s279 = scalar_lea.hbm %s0, %s278
          %s280 = sshll.u32 %s279, 4
          %s281 = int_to_ptr.hbm [resolvable:$true] %s280
          %s282 = sshll.u32 %s273, 4
          %s283 = int_to_ptr.vmem [resolvable:$true] %s282
          %288 = dma.hbm_to_vmem [thread:$0]  %s281, 2048, %s283, %s270, 256, 128, 8
        $region36: #{tpu_custom_call.1} parent=31 // pred_fallthru
          _
        // Predicated region
        $region37: #{tpu_custom_call.1} parent=31 // pred_check
          %p289 = pneg %p80
        $region38: #{tpu_custom_call.1} parent=31 // pred_check_branch
          %291 = sbr.rel (%p289) target = $region40
        $region39: #{tpu_custom_call.1} parent=31 // pred_region
          %p292 = scmp.lt.s32.totalorder %s27, 1
          %s293 = scalar_select %p292, %s27, 1
          %s294 = smul.addr %s293, 16
          %s295 = smul.addr %s294, 8
          %s296 = scalar_lea.vmem %s1, %s295
        $region40: #{tpu_custom_call.1} parent=31 // pred_fallthru
          _
        // Predicated region
        $region41: #{tpu_custom_call.1} parent=31 // pred_check
          %p297 = pneg %p106
        $region42: #{tpu_custom_call.1} parent=31 // pred_check_branch
          %299 = sbr.rel (%p297) target = $region44
        $region43: #{tpu_custom_call.1} parent=31 // pred_region
          %p300 = scmp.lt.s32.totalorder %s27, 1
          %s301 = scalar_select %p300, %s27, 1
          %s302 = smul.addr %s301, 8
          %s303 = smul.addr %s302, 8
          %s304 = scalar_lea.vmem %s2, %s303
        $region44: #{tpu_custom_call.1} parent=31 // pred_fallthru
          _
      $region32: #{tpu_custom_call.1} parent=5 // pred_fallthru
        _
      %p305 = scmp.le.s32.totalorder 1, %s20
      %p306 = scmp.lt.s32.totalorder %s20, 5
      %p307 = pnand %p305, %p306
      %p308 = pneg %p307
      // Predicated region
      $region45: #{tpu_custom_call.1} parent=5 // pred_check
        _
      $region46: #{tpu_custom_call.1} parent=5 // pred_check_branch
        %310 = sbr.rel (%p307) target = $region48
      $region47: #{tpu_custom_call.1} parent=5 // pred_region
        %s311 = ssub.s32 %s20, 1
        %s312 = sand.u32 %s47, 1
        %s313 = scalar_lea.sflag [#allocation3], %s312
        %s314 = sand.u32 %s47, 1
        %s315 = smul.addr %s314, 128
        %s316 = scalar_lea.vmem [#allocation2], %s315
        // Predicated region
        $region49: #{tpu_custom_call.1} parent=47 // pred_check
          %p317 = pneg %p60
        $region50: #{tpu_custom_call.1} parent=47 // pred_check_branch
          %319 = sbr.rel (%p317) target = $region52
        $region51: #{tpu_custom_call.1} parent=47 // pred_region
          %321 = dma.done %s313, 2048
        $region52: #{tpu_custom_call.1} parent=47 // pred_fallthru
          _
        // Predicated region
        $region53: #{tpu_custom_call.1} parent=47 // pred_check
          %p322 = pneg %p175
        $region54: #{tpu_custom_call.1} parent=47 // pred_check_branch
          %324 = sbr.rel (%p322) target = $region56
        $region55: #{tpu_custom_call.1} parent=47 // pred_region
          %326 = dma.done [#allocation6], 1024
        $region56: #{tpu_custom_call.1} parent=47 // pred_fallthru
          _
        %s327 = sand.u32 %s47, 1
        %s328 = scalar_lea.sflag [#allocation3], %s327
        %s329 = sand.u32 %s47, 1
        %s330 = smul.addr %s329, 128
        %s331 = scalar_lea.vmem [#allocation2], %s330
        %p332 = pneg %p60
        %p333 = pneg %p57
        %p334 = scmp.lt.s32.totalorder %s29, 1
        %s335 = scalar_select %p334, %s29, 1
        %s336 = smul.addr %s335, 16
        %s337 = smul.addr %s336, 8
        %s338 = scalar_lea.vmem %s1, %s337
        %p339 = pneg %p86
        %p340 = pneg %p83
        %p341 = scmp.lt.s32.totalorder %s29, 1
        %s342 = scalar_select %p341, %s29, 1
        %s343 = smul.addr %s342, 8
        %s344 = smul.addr %s343, 8
        %s345 = scalar_lea.vmem %s2, %s344
        %p346 = pneg %p112
        %p347 = pneg %p109
        %p348 = pneg %p133
        %p349 = pneg %p130
        %p350 = pneg %p154
        %p351 = pneg %p151
        %p352 = pneg %p175
        %p353 = pneg %p172
        %p354 = pneg %p196
        %p355 = pneg %p193
        %p356 = pneg %p224
        %p357 = pneg %p221
        %s358 = sand.u32 %s211, 1
        %s359 = scalar_lea.sflag [#allocation4], %s358
        %s360 = sand.u32 %s211, 1
        %s361 = smul.addr %s360, 128
        %s362 = scalar_lea.vmem [#allocation7], %s361
        %p363 = scmp.lt.s32.totalorder %s29, 1
        %s364 = scalar_select %p363, %s29, 1
        %s365 = smul.addr %s364, 16
        %s366 = smul.addr %s365, 8
        %s367 = scalar_lea.vmem %s1, %s366
        %p368 = scmp.lt.s32.totalorder %s29, 1
        %s369 = scalar_select %p368, %s29, 1
        %s370 = smul.addr %s369, 8
        %s371 = smul.addr %s370, 8
        %s372 = scalar_lea.vmem %s2, %s371
        %v373 = vld [vmem:[%s316] sm:$0xff]
        %v374 = vld [vmem:[%s316 + $0x8] sm:$0xff]
        %v375 = vld [vmem:[%s316 + $0x10] sm:$0xff]
        %v376 = vld [vmem:[%s316 + $0x18] sm:$0xff]
        %v377 = vld [vmem:[%s316 + $0x20] sm:$0xff]
        %v378 = vld [vmem:[%s316 + $0x28] sm:$0xff]
        %v379 = vld [vmem:[%s316 + $0x30] sm:$0xff]
        %v380 = vld [vmem:[%s316 + $0x38] sm:$0xff]
        %v381 = vld [vmem:[%s316 + $0x40] sm:$0xff]
        %v382 = vld [vmem:[%s316 + $0x48] sm:$0xff]
        %v383 = vld [vmem:[%s316 + $0x50] sm:$0xff]
        %v384 = vld [vmem:[%s316 + $0x58] sm:$0xff]
        %v385 = vld [vmem:[%s316 + $0x60] sm:$0xff]
        %v386 = vld [vmem:[%s316 + $0x68] sm:$0xff]
        %v387 = vld [vmem:[%s316 + $0x70] sm:$0xff]
        %v388 = vld [vmem:[%s316 + $0x78] sm:$0xff]
        %389 = vxpose.xlu0.b32.start [1/16] %v373, 128
        %390 = vxpose.xlu0.b32.cont [2/16] %v374, 128
        %391 = vxpose.xlu0.b32.cont [3/16] %v375, 128
        %392 = vxpose.xlu0.b32.cont [4/16] %v376, 128
        %393 = vxpose.xlu0.b32.cont [5/16] %v377, 128
        %394 = vxpose.xlu0.b32.cont [6/16] %v378, 128
        %395 = vxpose.xlu0.b32.cont [7/16] %v379, 128
        %396 = vxpose.xlu0.b32.cont [8/16] %v380, 128
        %397 = vxpose.xlu0.b32.cont [9/16] %v381, 128
        %398 = vxpose.xlu0.b32.cont [10/16] %v382, 128
        %399 = vxpose.xlu0.b32.cont [11/16] %v383, 128
        %400 = vxpose.xlu0.b32.cont [12/16] %v384, 128
        %401 = vxpose.xlu0.b32.cont [13/16] %v385, 128
        %402 = vxpose.xlu0.b32.cont [14/16] %v386, 128
        %403 = vxpose.xlu0.b32.cont [15/16] %v387, 128
        %404 = vxpose.xlu0.b32.end [16/16] %v388, 128
        %v405 = vpop.trf.xlu0
        %v406 = vpop.trf.xlu0
        %v407 = vpop.trf.xlu0
        %v408 = vpop.trf.xlu0
        %v409 = vpop.trf.xlu0
        %v410 = vpop.trf.xlu0
        %v411 = vpop.trf.xlu0
        %v412 = vpop.trf.xlu0
        %v413 = vpop.trf.xlu0
        %v414 = vpop.trf.xlu0
        %v415 = vpop.trf.xlu0
        %v416 = vpop.trf.xlu0
        %v417 = vpop.trf.xlu0
        %v418 = vpop.trf.xlu0
        %v419 = vpop.trf.xlu0
        %v420 = vpop.trf.xlu0
        %v421 = vld [vmem:[%s3] sm:$0xff]
        %v422 = vld [vmem:[%s3 + $0x8] sm:$0xff]
        %v423 = vld [vmem:[%s3 + $0x10] sm:$0xff]
        %v424 = vld [vmem:[%s3 + $0x18] sm:$0xff]
        %v425 = vld [vmem:[%s3 + $0x20] sm:$0xff]
        %v426 = vld [vmem:[%s3 + $0x28] sm:$0xff]
        %v427 = vld [vmem:[%s3 + $0x30] sm:$0xff]
        %v428 = vld [vmem:[%s3 + $0x38] sm:$0xff]
        %v429 = vld [vmem:[%s3 + $0x40] sm:$0xff]
        %v430 = vld [vmem:[%s3 + $0x48] sm:$0xff]
        %v431 = vld [vmem:[%s3 + $0x50] sm:$0xff]
        %v432 = vld [vmem:[%s3 + $0x58] sm:$0xff]
        %v433 = vld [vmem:[%s3 + $0x60] sm:$0xff]
        %v434 = vld [vmem:[%s3 + $0x68] sm:$0xff]
        %v435 = vld [vmem:[%s3 + $0x70] sm:$0xff]
        %v436 = vld [vmem:[%s3 + $0x78] sm:$0xff]
        %437 = vmatpush.msra.mxu0 %v436
        %438 = vmatpush.msra.mxu0 %v435
        %439 = vmatpush.msra.mxu0 %v434
        %440 = vmatpush.msra.mxu0 %v433
        %441 = vmatpush.msra.mxu0 %v432
        %442 = vmatpush.msra.mxu0 %v431
        %443 = vmatpush.msra.mxu0 %v430
        %444 = vmatpush.msra.mxu0 %v429
        %445 = vmatpush.msra.mxu0 %v428
        %446 = vmatpush.msra.mxu0 %v427
        %447 = vmatpush.msra.mxu0 %v426
        %448 = vmatpush.msra.mxu0 %v425
        %449 = vmatpush.msra.mxu0 %v424
        %450 = vmatpush.msra.mxu0 %v423
        %451 = vmatpush.msra.mxu0 %v422
        %452 = vmatpush.msra.mxu0 %v421
        %453 = vmatmul.f32.gmra.mxu0 %v405
        %v454 = vpop.f32.mrf.mxu0
        %v455 = vadd.f32 0.0, %v454
        %456 = vmatmul.f32.gmra.mxu0 %v406
        %v457 = vpop.f32.mrf.mxu0
        %v458 = vadd.f32 0.0, %v457
        %459 = vmatmul.f32.gmra.mxu0 %v407
        %v460 = vpop.f32.mrf.mxu0
        %v461 = vadd.f32 0.0, %v460
        %462 = vmatmul.f32.gmra.mxu0 %v408
        %v463 = vpop.f32.mrf.mxu0
        %v464 = vadd.f32 0.0, %v463
        %465 = vmatmul.f32.gmra.mxu0 %v409
        %v466 = vpop.f32.mrf.mxu0
        %v467 = vadd.f32 0.0, %v466
        %468 = vmatmul.f32.gmra.mxu0 %v410
        %v469 = vpop.f32.mrf.mxu0
        %v470 = vadd.f32 0.0, %v469
        %471 = vmatmul.f32.gmra.mxu0 %v411
        %v472 = vpop.f32.mrf.mxu0
        %v473 = vadd.f32 0.0, %v472
        %474 = vmatmul.f32.gmra.mxu0 %v412
        %v475 = vpop.f32.mrf.mxu0
        %v476 = vadd.f32 0.0, %v475
        %477 = vmatmul.f32.gmra.mxu0 %v413
        %v478 = vpop.f32.mrf.mxu0
        %v479 = vadd.f32 0.0, %v478
        %480 = vmatmul.f32.gmra.mxu0 %v414
        %v481 = vpop.f32.mrf.mxu0
        %v482 = vadd.f32 0.0, %v481
        %483 = vmatmul.f32.gmra.mxu0 %v415
        %v484 = vpop.f32.mrf.mxu0
        %v485 = vadd.f32 0.0, %v484
        %486 = vmatmul.f32.gmra.mxu0 %v416
        %v487 = vpop.f32.mrf.mxu0
        %v488 = vadd.f32 0.0, %v487
        %489 = vmatmul.f32.gmra.mxu0 %v417
        %v490 = vpop.f32.mrf.mxu0
        %v491 = vadd.f32 0.0, %v490
        %492 = vmatmul.f32.gmra.mxu0 %v418
        %v493 = vpop.f32.mrf.mxu0
        %v494 = vadd.f32 0.0, %v493
        %495 = vmatmul.f32.gmra.mxu0 %v419
        %v496 = vpop.f32.mrf.mxu0
        %v497 = vadd.f32 0.0, %v496
        %498 = vmatmul.f32.gmra.mxu0 %v420
        %v499 = vpop.f32.mrf.mxu0
        %v500 = vadd.f32 0.0, %v499
        %501 = vdwg.mxu0
        %v502 = vld [vmem:[%s367] sm:$0xff]
        %v503 = vld [vmem:[%s367 + $0x8] sm:$0xff]
        %v504 = vld [vmem:[%s367 + $0x10] sm:$0xff]
        %v505 = vld [vmem:[%s367 + $0x18] sm:$0xff]
        %v506 = vld [vmem:[%s367 + $0x20] sm:$0xff]
        %v507 = vld [vmem:[%s367 + $0x28] sm:$0xff]
        %v508 = vld [vmem:[%s367 + $0x30] sm:$0xff]
        %v509 = vld [vmem:[%s367 + $0x38] sm:$0xff]
        %v510 = vld [vmem:[%s367 + $0x40] sm:$0xff]
        %v511 = vld [vmem:[%s367 + $0x48] sm:$0xff]
        %v512 = vld [vmem:[%s367 + $0x50] sm:$0xff]
        %v513 = vld [vmem:[%s367 + $0x58] sm:$0xff]
        %v514 = vld [vmem:[%s367 + $0x60] sm:$0xff]
        %v515 = vld [vmem:[%s367 + $0x68] sm:$0xff]
        %v516 = vld [vmem:[%s367 + $0x70] sm:$0xff]
        %v517 = vld [vmem:[%s367 + $0x78] sm:$0xff]
        %518 = vmatpush.msra.mxu0 %v517
        %519 = vmatpush.msra.mxu0 %v516
        %520 = vmatpush.msra.mxu0 %v515
        %521 = vmatpush.msra.mxu0 %v514
        %522 = vmatpush.msra.mxu0 %v513
        %523 = vmatpush.msra.mxu0 %v512
        %524 = vmatpush.msra.mxu0 %v511
        %525 = vmatpush.msra.mxu0 %v510
        %526 = vmatpush.msra.mxu0 %v509
        %527 = vmatpush.msra.mxu0 %v508
        %528 = vmatpush.msra.mxu0 %v507
        %529 = vmatpush.msra.mxu0 %v506
        %530 = vmatpush.msra.mxu0 %v505
        %531 = vmatpush.msra.mxu0 %v504
        %532 = vmatpush.msra.mxu0 %v503
        %533 = vmatpush.msra.mxu0 %v502
        %534 = vmatmul.f32.gmra.mxu0 %v455
        %v535 = vpop.f32.mrf.mxu0
        %v536 = vadd.f32 0.0, %v535
        %537 = vmatmul.f32.gmra.mxu0 %v458
        %v538 = vpop.f32.mrf.mxu0
        %v539 = vadd.f32 0.0, %v538
        %540 = vmatmul.f32.gmra.mxu0 %v461
        %v541 = vpop.f32.mrf.mxu0
        %v542 = vadd.f32 0.0, %v541
        %543 = vmatmul.f32.gmra.mxu0 %v464
        %v544 = vpop.f32.mrf.mxu0
        %v545 = vadd.f32 0.0, %v544
        %546 = vmatmul.f32.gmra.mxu0 %v467
        %v547 = vpop.f32.mrf.mxu0
        %v548 = vadd.f32 0.0, %v547
        %549 = vmatmul.f32.gmra.mxu0 %v470
        %v550 = vpop.f32.mrf.mxu0
        %v551 = vadd.f32 0.0, %v550
        %552 = vmatmul.f32.gmra.mxu0 %v473
        %v553 = vpop.f32.mrf.mxu0
        %v554 = vadd.f32 0.0, %v553
        %555 = vmatmul.f32.gmra.mxu0 %v476
        %v556 = vpop.f32.mrf.mxu0
        %v557 = vadd.f32 0.0, %v556
        %558 = vmatmul.f32.gmra.mxu0 %v479
        %v559 = vpop.f32.mrf.mxu0
        %v560 = vadd.f32 0.0, %v559
        %561 = vmatmul.f32.gmra.mxu0 %v482
        %v562 = vpop.f32.mrf.mxu0
        %v563 = vadd.f32 0.0, %v562
        %564 = vmatmul.f32.gmra.mxu0 %v485
        %v565 = vpop.f32.mrf.mxu0
        %v566 = vadd.f32 0.0, %v565
        %567 = vmatmul.f32.gmra.mxu0 %v488
        %v568 = vpop.f32.mrf.mxu0
        %v569 = vadd.f32 0.0, %v568
        %570 = vmatmul.f32.gmra.mxu0 %v491
        %v571 = vpop.f32.mrf.mxu0
        %v572 = vadd.f32 0.0, %v571
        %573 = vmatmul.f32.gmra.mxu0 %v494
        %v574 = vpop.f32.mrf.mxu0
        %v575 = vadd.f32 0.0, %v574
        %576 = vmatmul.f32.gmra.mxu0 %v497
        %v577 = vpop.f32.mrf.mxu0
        %v578 = vadd.f32 0.0, %v577
        %579 = vmatmul.f32.gmra.mxu0 %v500
        %v580 = vpop.f32.mrf.mxu0
        %v581 = vadd.f32 0.0, %v580
        %582 = vdwg.mxu0
        %v583 = vmul.f32 %v536, 0.25
        %v584 = vmul.f32 %v539, 0.25
        %v585 = vmul.f32 %v542, 0.25
        %v586 = vmul.f32 %v545, 0.25
        %v587 = vmul.f32 %v548, 0.25
        %v588 = vmul.f32 %v551, 0.25
        %v589 = vmul.f32 %v554, 0.25
        %v590 = vmul.f32 %v557, 0.25
        %v591 = vmul.f32 %v560, 0.25
        %v592 = vmul.f32 %v563, 0.25
        %v593 = vmul.f32 %v566, 0.25
        %v594 = vmul.f32 %v569, 0.25
        %v595 = vmul.f32 %v572, 0.25
        %v596 = vmul.f32 %v575, 0.25
        %v597 = vmul.f32 %v578, 0.25
        %v598 = vmul.f32 %v581, 0.25
        %vm599 = vcmask 523264
        %v600 = vsel %vm599, %v583, -inf
        %601 = vmax.xlane.f32.xlu0 %v600
        %v602 = vpop.xlane.xlu0 %601
        %v603 = vsel %vm599, %v584, -inf
        %604 = vmax.xlane.f32.xlu0 %v603
        %v605 = vpop.xlane.xlu0 %604
        %v606 = vsel %vm599, %v585, -inf
        %607 = vmax.xlane.f32.xlu0 %v606
        %v608 = vpop.xlane.xlu0 %607
        %v609 = vsel %vm599, %v586, -inf
        %610 = vmax.xlane.f32.xlu0 %v609
        %v611 = vpop.xlane.xlu0 %610
        %v612 = vsel %vm599, %v587, -inf
        %613 = vmax.xlane.f32.xlu0 %v612
        %v614 = vpop.xlane.xlu0 %613
        %v615 = vsel %vm599, %v588, -inf
        %616 = vmax.xlane.f32.xlu0 %v615
        %v617 = vpop.xlane.xlu0 %616
        %v618 = vsel %vm599, %v589, -inf
        %619 = vmax.xlane.f32.xlu0 %v618
        %v620 = vpop.xlane.xlu0 %619
        %v621 = vsel %vm599, %v590, -inf
        %622 = vmax.xlane.f32.xlu0 %v621
        %v623 = vpop.xlane.xlu0 %622
        %v624 = vsel %vm599, %v591, -inf
        %625 = vmax.xlane.f32.xlu0 %v624
        %v626 = vpop.xlane.xlu0 %625
        %v627 = vsel %vm599, %v592, -inf
        %628 = vmax.xlane.f32.xlu0 %v627
        %v629 = vpop.xlane.xlu0 %628
        %v630 = vsel %vm599, %v593, -inf
        %631 = vmax.xlane.f32.xlu0 %v630
        %v632 = vpop.xlane.xlu0 %631
        %v633 = vsel %vm599, %v594, -inf
        %634 = vmax.xlane.f32.xlu0 %v633
        %v635 = vpop.xlane.xlu0 %634
        %v636 = vsel %vm599, %v595, -inf
        %637 = vmax.xlane.f32.xlu0 %v636
        %v638 = vpop.xlane.xlu0 %637
        %v639 = vsel %vm599, %v596, -inf
        %640 = vmax.xlane.f32.xlu0 %v639
        %v641 = vpop.xlane.xlu0 %640
        %v642 = vsel %vm599, %v597, -inf
        %643 = vmax.xlane.f32.xlu0 %v642
        %v644 = vpop.xlane.xlu0 %643
        %v645 = vsel %vm599, %v598, -inf
        %646 = vmax.xlane.f32.xlu0 %v645
        %v647 = vpop.xlane.xlu0 %646
        %v648 = vsub.f32 %v583, %v602
        %v649 = vsub.f32 %v584, %v605
        %v650 = vsub.f32 %v585, %v608
        %v651 = vsub.f32 %v586, %v611
        %v652 = vsub.f32 %v587, %v614
        %v653 = vsub.f32 %v588, %v617
        %v654 = vsub.f32 %v589, %v620
        %v655 = vsub.f32 %v590, %v623
        %v656 = vsub.f32 %v591, %v626
        %v657 = vsub.f32 %v592, %v629
        %v658 = vsub.f32 %v593, %v632
        %v659 = vsub.f32 %v594, %v635
        %v660 = vsub.f32 %v595, %v638
        %v661 = vsub.f32 %v596, %v641
        %v662 = vsub.f32 %v597, %v644
        %v663 = vsub.f32 %v598, %v647
        %v664 = vmul.f32 %v648, 1.442695
        %v665 = vpow.pop %v664
        %v666 = vmul.f32 %v649, 1.442695
        %v667 = vpow.pop %v666
        %v668 = vmul.f32 %v650, 1.442695
        %v669 = vpow.pop %v668
        %v670 = vmul.f32 %v651, 1.442695
        %v671 = vpow.pop %v670
        %v672 = vmul.f32 %v652, 1.442695
        %v673 = vpow.pop %v672
        %v674 = vmul.f32 %v653, 1.442695
        %v675 = vpow.pop %v674
        %v676 = vmul.f32 %v654, 1.442695
        %v677 = vpow.pop %v676
        %v678 = vmul.f32 %v655, 1.442695
        %v679 = vpow.pop %v678
        %v680 = vmul.f32 %v656, 1.442695
        %v681 = vpow.pop %v680
        %v682 = vmul.f32 %v657, 1.442695
        %v683 = vpow.pop %v682
        %v684 = vmul.f32 %v658, 1.442695
        %v685 = vpow.pop %v684
        %v686 = vmul.f32 %v659, 1.442695
        %v687 = vpow.pop %v686
        %v688 = vmul.f32 %v660, 1.442695
        %v689 = vpow.pop %v688
        %v690 = vmul.f32 %v661, 1.442695
        %v691 = vpow.pop %v690
        %v692 = vmul.f32 %v662, 1.442695
        %v693 = vpow.pop %v692
        %v694 = vmul.f32 %v663, 1.442695
        %v695 = vpow.pop %v694
        %v696 = vld [vmem:[#allocation5] sm:$0xff]
        %v697 = vld [vmem:[#allocation5 + $0x8] sm:$0xff]
        %v698 = vld [vmem:[#allocation5 + $0x10] sm:$0xff]
        %v699 = vld [vmem:[#allocation5 + $0x18] sm:$0xff]
        %v700 = vld [vmem:[#allocation5 + $0x20] sm:$0xff]
        %v701 = vld [vmem:[#allocation5 + $0x28] sm:$0xff]
        %v702 = vld [vmem:[#allocation5 + $0x30] sm:$0xff]
        %v703 = vld [vmem:[#allocation5 + $0x38] sm:$0xff]
        %v705 = vsel %vm599, %v665, 0
        %v708 = vsel %vm599, %v667, 0
        %v711 = vsel %vm599, %v669, 0
        %v714 = vsel %vm599, %v671, 0
        %v717 = vsel %vm599, %v673, 0
        %v720 = vsel %vm599, %v675, 0
        %v723 = vsel %vm599, %v677, 0
        %v726 = vsel %vm599, %v679, 0
        %v729 = vsel %vm599, %v681, 0
        %v732 = vsel %vm599, %v683, 0
        %v735 = vsel %vm599, %v685, 0
        %v738 = vsel %vm599, %v687, 0
        %v741 = vsel %vm599, %v689, 0
        %v744 = vsel %vm599, %v691, 0
        %v747 = vsel %vm599, %v693, 0
        %v750 = vsel %vm599, %v695, 0
        %752 = vmatpush.msra.mxu0 0.0
        %753 = vmatpush.msra.mxu0 0.0
        %754 = vmatpush.msra.mxu0 0.0
        %755 = vmatpush.msra.mxu0 0.0
        %756 = vmatpush.msra.mxu0 0.0
        %757 = vmatpush.msra.mxu0 0.0
        %758 = vmatpush.msra.mxu0 0.0
        %759 = vmatpush.msra.mxu0 0.0
        %760 = vmatpush.msra.mxu0 %v703
        %761 = vmatpush.msra.mxu0 %v702
        %762 = vmatpush.msra.mxu0 %v701
        %763 = vmatpush.msra.mxu0 %v700
        %764 = vmatpush.msra.mxu0 %v699
        %765 = vmatpush.msra.mxu0 %v698
        %766 = vmatpush.msra.mxu0 %v697
        %767 = vmatpush.msra.mxu0 %v696
        %768 = vmatmul.f32.gmra.mxu0 %v705
        %v769 = vpop.f32.mrf.mxu0
        %v770 = vadd.f32 0.0, %v769
        %771 = vmatmul.f32.gmra.mxu0 %v708
        %v772 = vpop.f32.mrf.mxu0
        %v773 = vadd.f32 0.0, %v772
        %774 = vmatmul.f32.gmra.mxu0 %v711
        %v775 = vpop.f32.mrf.mxu0
        %v776 = vadd.f32 0.0, %v775
        %777 = vmatmul.f32.gmra.mxu0 %v714
        %v778 = vpop.f32.mrf.mxu0
        %v779 = vadd.f32 0.0, %v778
        %780 = vmatmul.f32.gmra.mxu0 %v717
        %v781 = vpop.f32.mrf.mxu0
        %v782 = vadd.f32 0.0, %v781
        %783 = vmatmul.f32.gmra.mxu0 %v720
        %v784 = vpop.f32.mrf.mxu0
        %v785 = vadd.f32 0.0, %v784
        %786 = vmatmul.f32.gmra.mxu0 %v723
        %v787 = vpop.f32.mrf.mxu0
        %v788 = vadd.f32 0.0, %v787
        %789 = vmatmul.f32.gmra.mxu0 %v726
        %v790 = vpop.f32.mrf.mxu0
        %v791 = vadd.f32 0.0, %v790
        %792 = vmatmul.f32.gmra.mxu0 %v729
        %v793 = vpop.f32.mrf.mxu0
        %v794 = vadd.f32 0.0, %v793
        %795 = vmatmul.f32.gmra.mxu0 %v732
        %v796 = vpop.f32.mrf.mxu0
        %v797 = vadd.f32 0.0, %v796
        %798 = vmatmul.f32.gmra.mxu0 %v735
        %v799 = vpop.f32.mrf.mxu0
        %v800 = vadd.f32 0.0, %v799
        %801 = vmatmul.f32.gmra.mxu0 %v738
        %v802 = vpop.f32.mrf.mxu0
        %v803 = vadd.f32 0.0, %v802
        %804 = vmatmul.f32.gmra.mxu0 %v741
        %v805 = vpop.f32.mrf.mxu0
        %v806 = vadd.f32 0.0, %v805
        %807 = vmatmul.f32.gmra.mxu0 %v744
        %v808 = vpop.f32.mrf.mxu0
        %v809 = vadd.f32 0.0, %v808
        %810 = vmatmul.f32.gmra.mxu0 %v747
        %v811 = vpop.f32.mrf.mxu0
        %v812 = vadd.f32 0.0, %v811
        %813 = vmatmul.f32.gmra.mxu0 %v750
        %v814 = vpop.f32.mrf.mxu0
        %v815 = vadd.f32 0.0, %v814
        %816 = vdwg.mxu0
        %v817 = vmax.f32 %v770, 1e-30
        %v818 = vmax.f32 %v773, 1e-30
        %v819 = vmax.f32 %v776, 1e-30
        %v820 = vmax.f32 %v779, 1e-30
        %v821 = vmax.f32 %v782, 1e-30
        %v822 = vmax.f32 %v785, 1e-30
        %v823 = vmax.f32 %v788, 1e-30
        %v824 = vmax.f32 %v791, 1e-30
        %v825 = vmax.f32 %v794, 1e-30
        %v826 = vmax.f32 %v797, 1e-30
        %v827 = vmax.f32 %v800, 1e-30
        %v828 = vmax.f32 %v803, 1e-30
        %v829 = vmax.f32 %v806, 1e-30
        %v830 = vmax.f32 %v809, 1e-30
        %v831 = vmax.f32 %v812, 1e-30
        %v832 = vmax.f32 %v815, 1e-30
        %v833 = vrcp.pop %v817
        %v834 = vmul.f32 %v817, %v833
        %v835 = vsub.f32 1.0, %v834
        %v836 = vmul.f32 %v833, %v835
        %v837 = vadd.f32 %v833, %v836
        %vm838 = vweird.f32 %v817
        %vm839 = vweird.f32 %v833
        %vm840 = vmor %vm838, %vm839
        %v841 = vsel %vm840, %v833, %v837
        %v842 = vand.u32 2147483647, %v817
        %vm843 = vcmp.eq.f32.partialorder %v842, 8.507059e+37
        %v844 = vand.u32 %v817, 2147483648
        %v845 = vor.u32 1.1754944e-38, %v844
        %v846 = vsel %vm843, %v845, %v841
        %v847 = vrcp.pop %v818
        %v848 = vmul.f32 %v818, %v847
        %v849 = vsub.f32 1.0, %v848
        %v850 = vmul.f32 %v847, %v849
        %v851 = vadd.f32 %v847, %v850
        %vm852 = vweird.f32 %v818
        %vm853 = vweird.f32 %v847
        %vm854 = vmor %vm852, %vm853
        %v855 = vsel %vm854, %v847, %v851
        %v856 = vand.u32 2147483647, %v818
        %vm857 = vcmp.eq.f32.partialorder %v856, 8.507059e+37
        %v858 = vand.u32 %v818, 2147483648
        %v859 = vor.u32 1.1754944e-38, %v858
        %v860 = vsel %vm857, %v859, %v855
        %v861 = vrcp.pop %v819
        %v862 = vmul.f32 %v819, %v861
        %v863 = vsub.f32 1.0, %v862
        %v864 = vmul.f32 %v861, %v863
        %v865 = vadd.f32 %v861, %v864
        %vm866 = vweird.f32 %v819
        %vm867 = vweird.f32 %v861
        %vm868 = vmor %vm866, %vm867
        %v869 = vsel %vm868, %v861, %v865
        %v870 = vand.u32 2147483647, %v819
        %vm871 = vcmp.eq.f32.partialorder %v870, 8.507059e+37
        %v872 = vand.u32 %v819, 2147483648
        %v873 = vor.u32 1.1754944e-38, %v872
        %v874 = vsel %vm871, %v873, %v869
        %v875 = vrcp.pop %v820
        %v876 = vmul.f32 %v820, %v875
        %v877 = vsub.f32 1.0, %v876
        %v878 = vmul.f32 %v875, %v877
        %v879 = vadd.f32 %v875, %v878
        %vm880 = vweird.f32 %v820
        %vm881 = vweird.f32 %v875
        %vm882 = vmor %vm880, %vm881
        %v883 = vsel %vm882, %v875, %v879
        %v884 = vand.u32 2147483647, %v820
        %vm885 = vcmp.eq.f32.partialorder %v884, 8.507059e+37
        %v886 = vand.u32 %v820, 2147483648
        %v887 = vor.u32 1.1754944e-38, %v886
        %v888 = vsel %vm885, %v887, %v883
        %v889 = vrcp.pop %v821
        %v890 = vmul.f32 %v821, %v889
        %v891 = vsub.f32 1.0, %v890
        %v892 = vmul.f32 %v889, %v891
        %v893 = vadd.f32 %v889, %v892
        %vm894 = vweird.f32 %v821
        %vm895 = vweird.f32 %v889
        %vm896 = vmor %vm894, %vm895
        %v897 = vsel %vm896, %v889, %v893
        %v898 = vand.u32 2147483647, %v821
        %vm899 = vcmp.eq.f32.partialorder %v898, 8.507059e+37
        %v900 = vand.u32 %v821, 2147483648
        %v901 = vor.u32 1.1754944e-38, %v900
        %v902 = vsel %vm899, %v901, %v897
        %v903 = vrcp.pop %v822
        %v904 = vmul.f32 %v822, %v903
        %v905 = vsub.f32 1.0, %v904
        %v906 = vmul.f32 %v903, %v905
        %v907 = vadd.f32 %v903, %v906
        %vm908 = vweird.f32 %v822
        %vm909 = vweird.f32 %v903
        %vm910 = vmor %vm908, %vm909
        %v911 = vsel %vm910, %v903, %v907
        %v912 = vand.u32 2147483647, %v822
        %vm913 = vcmp.eq.f32.partialorder %v912, 8.507059e+37
        %v914 = vand.u32 %v822, 2147483648
        %v915 = vor.u32 1.1754944e-38, %v914
        %v916 = vsel %vm913, %v915, %v911
        %v917 = vrcp.pop %v823
        %v918 = vmul.f32 %v823, %v917
        %v919 = vsub.f32 1.0, %v918
        %v920 = vmul.f32 %v917, %v919
        %v921 = vadd.f32 %v917, %v920
        %vm922 = vweird.f32 %v823
        %vm923 = vweird.f32 %v917
        %vm924 = vmor %vm922, %vm923
        %v925 = vsel %vm924, %v917, %v921
        %v926 = vand.u32 2147483647, %v823
        %vm927 = vcmp.eq.f32.partialorder %v926, 8.507059e+37
        %v928 = vand.u32 %v823, 2147483648
        %v929 = vor.u32 1.1754944e-38, %v928
        %v930 = vsel %vm927, %v929, %v925
        %v931 = vrcp.pop %v824
        %v932 = vmul.f32 %v824, %v931
        %v933 = vsub.f32 1.0, %v932
        %v934 = vmul.f32 %v931, %v933
        %v935 = vadd.f32 %v931, %v934
        %vm936 = vweird.f32 %v824
        %vm937 = vweird.f32 %v931
        %vm938 = vmor %vm936, %vm937
        %v939 = vsel %vm938, %v931, %v935
        %v940 = vand.u32 2147483647, %v824
        %vm941 = vcmp.eq.f32.partialorder %v940, 8.507059e+37
        %v942 = vand.u32 %v824, 2147483648
        %v943 = vor.u32 1.1754944e-38, %v942
        %v944 = vsel %vm941, %v943, %v939
        %v945 = vrcp.pop %v825
        %v946 = vmul.f32 %v825, %v945
        %v947 = vsub.f32 1.0, %v946
        %v948 = vmul.f32 %v945, %v947
        %v949 = vadd.f32 %v945, %v948
        %vm950 = vweird.f32 %v825
        %vm951 = vweird.f32 %v945
        %vm952 = vmor %vm950, %vm951
        %v953 = vsel %vm952, %v945, %v949
        %v954 = vand.u32 2147483647, %v825
        %vm955 = vcmp.eq.f32.partialorder %v954, 8.507059e+37
        %v956 = vand.u32 %v825, 2147483648
        %v957 = vor.u32 1.1754944e-38, %v956
        %v958 = vsel %vm955, %v957, %v953
        %v959 = vrcp.pop %v826
        %v960 = vmul.f32 %v826, %v959
        %v961 = vsub.f32 1.0, %v960
        %v962 = vmul.f32 %v959, %v961
        %v963 = vadd.f32 %v959, %v962
        %vm964 = vweird.f32 %v826
        %vm965 = vweird.f32 %v959
        %vm966 = vmor %vm964, %vm965
        %v967 = vsel %vm966, %v959, %v963
        %v968 = vand.u32 2147483647, %v826
        %vm969 = vcmp.eq.f32.partialorder %v968, 8.507059e+37
        %v970 = vand.u32 %v826, 2147483648
        %v971 = vor.u32 1.1754944e-38, %v970
        %v972 = vsel %vm969, %v971, %v967
        %v973 = vrcp.pop %v827
        %v974 = vmul.f32 %v827, %v973
        %v975 = vsub.f32 1.0, %v974
        %v976 = vmul.f32 %v973, %v975
        %v977 = vadd.f32 %v973, %v976
        %vm978 = vweird.f32 %v827
        %vm979 = vweird.f32 %v973
        %vm980 = vmor %vm978, %vm979
        %v981 = vsel %vm980, %v973, %v977
        %v982 = vand.u32 2147483647, %v827
        %vm983 = vcmp.eq.f32.partialorder %v982, 8.507059e+37
        %v984 = vand.u32 %v827, 2147483648
        %v985 = vor.u32 1.1754944e-38, %v984
        %v986 = vsel %vm983, %v985, %v981
        %v987 = vrcp.pop %v828
        %v988 = vmul.f32 %v828, %v987
        %v989 = vsub.f32 1.0, %v988
        %v990 = vmul.f32 %v987, %v989
        %v991 = vadd.f32 %v987, %v990
        %vm992 = vweird.f32 %v828
        %vm993 = vweird.f32 %v987
        %vm994 = vmor %vm992, %vm993
        %v995 = vsel %vm994, %v987, %v991
        %v996 = vand.u32 2147483647, %v828
        %vm997 = vcmp.eq.f32.partialorder %v996, 8.507059e+37
        %v998 = vand.u32 %v828, 2147483648
        %v999 = vor.u32 1.1754944e-38, %v998
        %v1000 = vsel %vm997, %v999, %v995
        %v1001 = vrcp.pop %v829
        %v1002 = vmul.f32 %v829, %v1001
        %v1003 = vsub.f32 1.0, %v1002
        %v1004 = vmul.f32 %v1001, %v1003
        %v1005 = vadd.f32 %v1001, %v1004
        %vm1006 = vweird.f32 %v829
        %vm1007 = vweird.f32 %v1001
        %vm1008 = vmor %vm1006, %vm1007
        %v1009 = vsel %vm1008, %v1001, %v1005
        %v1010 = vand.u32 2147483647, %v829
        %vm1011 = vcmp.eq.f32.partialorder %v1010, 8.507059e+37
        %v1012 = vand.u32 %v829, 2147483648
        %v1013 = vor.u32 1.1754944e-38, %v1012
        %v1014 = vsel %vm1011, %v1013, %v1009
        %v1015 = vrcp.pop %v830
        %v1016 = vmul.f32 %v830, %v1015
        %v1017 = vsub.f32 1.0, %v1016
        %v1018 = vmul.f32 %v1015, %v1017
        %v1019 = vadd.f32 %v1015, %v1018
        %vm1020 = vweird.f32 %v830
        %vm1021 = vweird.f32 %v1015
        %vm1022 = vmor %vm1020, %vm1021
        %v1023 = vsel %vm1022, %v1015, %v1019
        %v1024 = vand.u32 2147483647, %v830
        %vm1025 = vcmp.eq.f32.partialorder %v1024, 8.507059e+37
        %v1026 = vand.u32 %v830, 2147483648
        %v1027 = vor.u32 1.1754944e-38, %v1026
        %v1028 = vsel %vm1025, %v1027, %v1023
        %v1029 = vrcp.pop %v831
        %v1030 = vmul.f32 %v831, %v1029
        %v1031 = vsub.f32 1.0, %v1030
        %v1032 = vmul.f32 %v1029, %v1031
        %v1033 = vadd.f32 %v1029, %v1032
        %vm1034 = vweird.f32 %v831
        %vm1035 = vweird.f32 %v1029
        %vm1036 = vmor %vm1034, %vm1035
        %v1037 = vsel %vm1036, %v1029, %v1033
        %v1038 = vand.u32 2147483647, %v831
        %vm1039 = vcmp.eq.f32.partialorder %v1038, 8.507059e+37
        %v1040 = vand.u32 %v831, 2147483648
        %v1041 = vor.u32 1.1754944e-38, %v1040
        %v1042 = vsel %vm1039, %v1041, %v1037
        %v1043 = vrcp.pop %v832
        %v1044 = vmul.f32 %v832, %v1043
        %v1045 = vsub.f32 1.0, %v1044
        %v1046 = vmul.f32 %v1043, %v1045
        %v1047 = vadd.f32 %v1043, %v1046
        %vm1048 = vweird.f32 %v832
        %vm1049 = vweird.f32 %v1043
        %vm1050 = vmor %vm1048, %vm1049
        %v1051 = vsel %vm1050, %v1043, %v1047
        %v1052 = vand.u32 2147483647, %v832
        %vm1053 = vcmp.eq.f32.partialorder %v1052, 8.507059e+37
        %v1054 = vand.u32 %v832, 2147483648
        %v1055 = vor.u32 1.1754944e-38, %v1054
        %v1056 = vsel %vm1053, %v1055, %v1051
        %v1057 = vmul.f32 %v665, %v846
        %v1058 = vmul.f32 %v667, %v860
        %v1059 = vmul.f32 %v669, %v874
        %v1060 = vmul.f32 %v671, %v888
        %v1061 = vmul.f32 %v673, %v902
        %v1062 = vmul.f32 %v675, %v916
        %v1063 = vmul.f32 %v677, %v930
        %v1064 = vmul.f32 %v679, %v944
        %v1065 = vmul.f32 %v681, %v958
        %v1066 = vmul.f32 %v683, %v972
        %v1067 = vmul.f32 %v685, %v986
        %v1068 = vmul.f32 %v687, %v1000
        %v1069 = vmul.f32 %v689, %v1014
        %v1070 = vmul.f32 %v691, %v1028
        %v1071 = vmul.f32 %v693, %v1042
        %v1072 = vmul.f32 %v695, %v1056
        %v1073 = vld [vmem:[%s372] sm:$0xff]
        %v1074 = vld [vmem:[%s372 + $0x8] sm:$0xff]
        %v1075 = vld [vmem:[%s372 + $0x10] sm:$0xff]
        %v1076 = vld [vmem:[%s372 + $0x18] sm:$0xff]
        %v1077 = vld [vmem:[%s372 + $0x20] sm:$0xff]
        %v1078 = vld [vmem:[%s372 + $0x28] sm:$0xff]
        %v1079 = vld [vmem:[%s372 + $0x30] sm:$0xff]
        %v1080 = vld [vmem:[%s372 + $0x38] sm:$0xff]
        %v1082 = vsel %vm599, %v1057, 0
        %v1085 = vsel %vm599, %v1058, 0
        %v1088 = vsel %vm599, %v1059, 0
        %v1091 = vsel %vm599, %v1060, 0
        %v1094 = vsel %vm599, %v1061, 0
        %v1097 = vsel %vm599, %v1062, 0
        %v1100 = vsel %vm599, %v1063, 0
        %v1103 = vsel %vm599, %v1064, 0
        %v1106 = vsel %vm599, %v1065, 0
        %v1109 = vsel %vm599, %v1066, 0
        %v1112 = vsel %vm599, %v1067, 0
        %v1115 = vsel %vm599, %v1068, 0
        %v1118 = vsel %vm599, %v1069, 0
        %v1121 = vsel %vm599, %v1070, 0
        %v1124 = vsel %vm599, %v1071, 0
        %v1127 = vsel %vm599, %v1072, 0
        %1129 = vmatpush.msra.mxu0 0.0
        %1130 = vmatpush.msra.mxu0 0.0
        %1131 = vmatpush.msra.mxu0 0.0
        %1132 = vmatpush.msra.mxu0 0.0
        %1133 = vmatpush.msra.mxu0 0.0
        %1134 = vmatpush.msra.mxu0 0.0
        %1135 = vmatpush.msra.mxu0 0.0
        %1136 = vmatpush.msra.mxu0 0.0
        %1137 = vmatpush.msra.mxu0 %v1080
        %1138 = vmatpush.msra.mxu0 %v1079
        %1139 = vmatpush.msra.mxu0 %v1078
        %1140 = vmatpush.msra.mxu0 %v1077
        %1141 = vmatpush.msra.mxu0 %v1076
        %1142 = vmatpush.msra.mxu0 %v1075
        %1143 = vmatpush.msra.mxu0 %v1074
        %1144 = vmatpush.msra.mxu0 %v1073
        %1145 = vmatmul.f32.gmra.mxu0 %v1082
        %v1146 = vpop.f32.mrf.mxu0
        %v1147 = vadd.f32 0.0, %v1146
        %1148 = vmatmul.f32.gmra.mxu0 %v1085
        %v1149 = vpop.f32.mrf.mxu0
        %v1150 = vadd.f32 0.0, %v1149
        %1151 = vmatmul.f32.gmra.mxu0 %v1088
        %v1152 = vpop.f32.mrf.mxu0
        %v1153 = vadd.f32 0.0, %v1152
        %1154 = vmatmul.f32.gmra.mxu0 %v1091
        %v1155 = vpop.f32.mrf.mxu0
        %v1156 = vadd.f32 0.0, %v1155
        %1157 = vmatmul.f32.gmra.mxu0 %v1094
        %v1158 = vpop.f32.mrf.mxu0
        %v1159 = vadd.f32 0.0, %v1158
        %1160 = vmatmul.f32.gmra.mxu0 %v1097
        %v1161 = vpop.f32.mrf.mxu0
        %v1162 = vadd.f32 0.0, %v1161
        %1163 = vmatmul.f32.gmra.mxu0 %v1100
        %v1164 = vpop.f32.mrf.mxu0
        %v1165 = vadd.f32 0.0, %v1164
        %1166 = vmatmul.f32.gmra.mxu0 %v1103
        %v1167 = vpop.f32.mrf.mxu0
        %v1168 = vadd.f32 0.0, %v1167
        %1169 = vmatmul.f32.gmra.mxu0 %v1106
        %v1170 = vpop.f32.mrf.mxu0
        %v1171 = vadd.f32 0.0, %v1170
        %1172 = vmatmul.f32.gmra.mxu0 %v1109
        %v1173 = vpop.f32.mrf.mxu0
        %v1174 = vadd.f32 0.0, %v1173
        %1175 = vmatmul.f32.gmra.mxu0 %v1112
        %v1176 = vpop.f32.mrf.mxu0
        %v1177 = vadd.f32 0.0, %v1176
        %1178 = vmatmul.f32.gmra.mxu0 %v1115
        %v1179 = vpop.f32.mrf.mxu0
        %v1180 = vadd.f32 0.0, %v1179
        %1181 = vmatmul.f32.gmra.mxu0 %v1118
        %v1182 = vpop.f32.mrf.mxu0
        %v1183 = vadd.f32 0.0, %v1182
        %1184 = vmatmul.f32.gmra.mxu0 %v1121
        %v1185 = vpop.f32.mrf.mxu0
        %v1186 = vadd.f32 0.0, %v1185
        %1187 = vmatmul.f32.gmra.mxu0 %v1124
        %v1188 = vpop.f32.mrf.mxu0
        %v1189 = vadd.f32 0.0, %v1188
        %1190 = vmatmul.f32.gmra.mxu0 %v1127
        %v1191 = vpop.f32.mrf.mxu0
        %v1192 = vadd.f32 0.0, %v1191
        %1193 = vdwg.mxu0
        %v1194 = vld [vmem:[%s4] sm:$0xff]
        %v1195 = vld [vmem:[%s4 + $0x8] sm:$0xff]
        %v1196 = vld [vmem:[%s4 + $0x10] sm:$0xff]
        %v1197 = vld [vmem:[%s4 + $0x18] sm:$0xff]
        %v1198 = vld [vmem:[%s4 + $0x20] sm:$0xff]
        %v1199 = vld [vmem:[%s4 + $0x28] sm:$0xff]
        %v1200 = vld [vmem:[%s4 + $0x30] sm:$0xff]
        %v1201 = vld [vmem:[%s4 + $0x38] sm:$0xff]
        %v1202 = vld [vmem:[%s4 + $0x40] sm:$0xff]
        %v1203 = vld [vmem:[%s4 + $0x48] sm:$0xff]
        %v1204 = vld [vmem:[%s4 + $0x50] sm:$0xff]
        %v1205 = vld [vmem:[%s4 + $0x58] sm:$0xff]
        %v1206 = vld [vmem:[%s4 + $0x60] sm:$0xff]
        %v1207 = vld [vmem:[%s4 + $0x68] sm:$0xff]
        %v1208 = vld [vmem:[%s4 + $0x70] sm:$0xff]
        %v1209 = vld [vmem:[%s4 + $0x78] sm:$0xff]
        %v1210 = vld [vmem:[%s6] sm:$0x1]
        %v1212 = vperm.slane %v1210, 0
        %1214 = vmatpush.msra.mxu0 %v1209
        %1215 = vmatpush.msra.mxu0 %v1208
        %1216 = vmatpush.msra.mxu0 %v1207
        %1217 = vmatpush.msra.mxu0 %v1206
        %1218 = vmatpush.msra.mxu0 %v1205
        %1219 = vmatpush.msra.mxu0 %v1204
        %1220 = vmatpush.msra.mxu0 %v1203
        %1221 = vmatpush.msra.mxu0 %v1202
        %1222 = vmatpush.msra.mxu0 %v1201
        %1223 = vmatpush.msra.mxu0 %v1200
        %1224 = vmatpush.msra.mxu0 %v1199
        %1225 = vmatpush.msra.mxu0 %v1198
        %1226 = vmatpush.msra.mxu0 %v1197
        %1227 = vmatpush.msra.mxu0 %v1196
        %1228 = vmatpush.msra.mxu0 %v1195
        %1229 = vmatpush.msra.mxu0 %v1194
        %1230 = vmatmul.f32.gmra.mxu0 %v1147
        %v1231 = vpop.f32.mrf.mxu0
        %v1232 = vadd.f32 %v1212, %v1231
        %1233 = vmatmul.f32.gmra.mxu0 %v1150
        %v1234 = vpop.f32.mrf.mxu0
        %v1235 = vadd.f32 %v1212, %v1234
        %1236 = vmatmul.f32.gmra.mxu0 %v1153
        %v1237 = vpop.f32.mrf.mxu0
        %v1238 = vadd.f32 %v1212, %v1237
        %1239 = vmatmul.f32.gmra.mxu0 %v1156
        %v1240 = vpop.f32.mrf.mxu0
        %v1241 = vadd.f32 %v1212, %v1240
        %1242 = vmatmul.f32.gmra.mxu0 %v1159
        %v1243 = vpop.f32.mrf.mxu0
        %v1244 = vadd.f32 %v1212, %v1243
        %1245 = vmatmul.f32.gmra.mxu0 %v1162
        %v1246 = vpop.f32.mrf.mxu0
        %v1247 = vadd.f32 %v1212, %v1246
        %1248 = vmatmul.f32.gmra.mxu0 %v1165
        %v1249 = vpop.f32.mrf.mxu0
        %v1250 = vadd.f32 %v1212, %v1249
        %1251 = vmatmul.f32.gmra.mxu0 %v1168
        %v1252 = vpop.f32.mrf.mxu0
        %v1253 = vadd.f32 %v1212, %v1252
        %1254 = vmatmul.f32.gmra.mxu0 %v1171
        %v1255 = vpop.f32.mrf.mxu0
        %v1256 = vadd.f32 %v1212, %v1255
        %1257 = vmatmul.f32.gmra.mxu0 %v1174
        %v1258 = vpop.f32.mrf.mxu0
        %v1259 = vadd.f32 %v1212, %v1258
        %1260 = vmatmul.f32.gmra.mxu0 %v1177
        %v1261 = vpop.f32.mrf.mxu0
        %v1262 = vadd.f32 %v1212, %v1261
        %1263 = vmatmul.f32.gmra.mxu0 %v1180
        %v1264 = vpop.f32.mrf.mxu0
        %v1265 = vadd.f32 %v1212, %v1264
        %1266 = vmatmul.f32.gmra.mxu0 %v1183
        %v1267 = vpop.f32.mrf.mxu0
        %v1268 = vadd.f32 %v1212, %v1267
        %1269 = vmatmul.f32.gmra.mxu0 %v1186
        %v1270 = vpop.f32.mrf.mxu0
        %v1271 = vadd.f32 %v1212, %v1270
        %1272 = vmatmul.f32.gmra.mxu0 %v1189
        %v1273 = vpop.f32.mrf.mxu0
        %v1274 = vadd.f32 %v1212, %v1273
        %1275 = vmatmul.f32.gmra.mxu0 %v1192
        %v1276 = vpop.f32.mrf.mxu0
        %v1277 = vadd.f32 %v1212, %v1276
        %1278 = vdwg.mxu0
        %1279 = vxpose.xlu0.b32.start [1/16] %v1232, 128
        %1280 = vxpose.xlu0.b32.cont [2/16] %v1235, 128
        %1281 = vxpose.xlu0.b32.cont [3/16] %v1238, 128
        %1282 = vxpose.xlu0.b32.cont [4/16] %v1241, 128
        %1283 = vxpose.xlu0.b32.cont [5/16] %v1244, 128
        %1284 = vxpose.xlu0.b32.cont [6/16] %v1247, 128
        %1285 = vxpose.xlu0.b32.cont [7/16] %v1250, 128
        %1286 = vxpose.xlu0.b32.cont [8/16] %v1253, 128
        %1287 = vxpose.xlu0.b32.cont [9/16] %v1256, 128
        %1288 = vxpose.xlu0.b32.cont [10/16] %v1259, 128
        %1289 = vxpose.xlu0.b32.cont [11/16] %v1262, 128
        %1290 = vxpose.xlu0.b32.cont [12/16] %v1265, 128
        %1291 = vxpose.xlu0.b32.cont [13/16] %v1268, 128
        %1292 = vxpose.xlu0.b32.cont [14/16] %v1271, 128
        %1293 = vxpose.xlu0.b32.cont [15/16] %v1274, 128
        %1294 = vxpose.xlu0.b32.end [16/16] %v1277, 128
        %v1295 = vpop.trf.xlu0
        %v1296 = vpop.trf.xlu0
        %v1297 = vpop.trf.xlu0
        %v1298 = vpop.trf.xlu0
        %v1299 = vpop.trf.xlu0
        %v1300 = vpop.trf.xlu0
        %v1301 = vpop.trf.xlu0
        %v1302 = vpop.trf.xlu0
        %v1303 = vpop.trf.xlu0
        %v1304 = vpop.trf.xlu0
        %v1305 = vpop.trf.xlu0
        %v1306 = vpop.trf.xlu0
        %v1307 = vpop.trf.xlu0
        %v1308 = vpop.trf.xlu0
        %v1309 = vpop.trf.xlu0
        %v1310 = vpop.trf.xlu0
        %1311 = vst [vmem:[%s362] sm:$0xff] %v1295
        %1312 = vst [vmem:[%s362 + $0x8] sm:$0xff] %v1296
        %1313 = vst [vmem:[%s362 + $0x10] sm:$0xff] %v1297
        %1314 = vst [vmem:[%s362 + $0x18] sm:$0xff] %v1298
        %1315 = vst [vmem:[%s362 + $0x20] sm:$0xff] %v1299
        %1316 = vst [vmem:[%s362 + $0x28] sm:$0xff] %v1300
        %1317 = vst [vmem:[%s362 + $0x30] sm:$0xff] %v1301
        %1318 = vst [vmem:[%s362 + $0x38] sm:$0xff] %v1302
        %1319 = vst [vmem:[%s362 + $0x40] sm:$0xff] %v1303
        %1320 = vst [vmem:[%s362 + $0x48] sm:$0xff] %v1304
        %1321 = vst [vmem:[%s362 + $0x50] sm:$0xff] %v1305
        %1322 = vst [vmem:[%s362 + $0x58] sm:$0xff] %v1306
        %1323 = vst [vmem:[%s362 + $0x60] sm:$0xff] %v1307
        %1324 = vst [vmem:[%s362 + $0x68] sm:$0xff] %v1308
        %1325 = vst [vmem:[%s362 + $0x70] sm:$0xff] %v1309
        %1326 = vst [vmem:[%s362 + $0x78] sm:$0xff] %v1310
        %s1327 = sand.u32 %s211, 1
        %s1328 = scalar_lea.sflag [#allocation4], %s1327
        %s1329 = sand.u32 %s211, 1
        %s1330 = smul.addr %s1329, 128
        %s1331 = scalar_lea.vmem [#allocation7], %s1330
        // Predicated region
        $region57: #{tpu_custom_call.1} parent=47 // pred_check
          %p1332 = pneg %p221
        $region58: #{tpu_custom_call.1} parent=47 // pred_check_branch
          %1334 = sbr.rel (%p1332) target = $region60
        $region59: #{tpu_custom_call.1} parent=47 // pred_region
          %1336 = vsyncadd %s1328, 0
          %s1337 = smul.addr %s29, 32
          %s1338 = sadd.s32 %s30, %s1337
          %s1339 = smul.addr %s1338, 8
          %s1340 = scalar_lea.hbm %s7, %s1339
          %s1341 = sshll.u32 %s1331, 4
          %s1342 = int_to_ptr.vmem [resolvable:$true] %s1341
          %s1343 = sshll.u32 %s1340, 4
          %s1344 = int_to_ptr.hbm [resolvable:$true] %s1343
          %1349 = dma.vmem_to_hbm [thread:$0]  %s1342, 2048, %s1344, %s1328, 128, 256, 8
        $region60: #{tpu_custom_call.1} parent=47 // pred_fallthru
          _
      $region48: #{tpu_custom_call.1} parent=5 // pred_fallthru
        _
      %p1350 = scmp.le.s32.totalorder 2, %s20
      // Predicated region
      $region61: #{tpu_custom_call.1} parent=5 // pred_check
        %p1351 = pneg %p1350
      $region62: #{tpu_custom_call.1} parent=5 // pred_check_branch
        %1353 = sbr.rel (%p1351) target = $region64
      $region63: #{tpu_custom_call.1} parent=5 // pred_region
        %s1354 = ssub.s32 %s20, 2
        // Predicated region
        $region65: #{tpu_custom_call.1} parent=63 // pred_check
          %p1355 = pneg %p227
        $region66: #{tpu_custom_call.1} parent=63 // pred_check_branch
          %1357 = sbr.rel (%p1355) target = $region68
        $region67: #{tpu_custom_call.1} parent=63 // pred_region
          %s1358 = sand.u32 %s212, 1
          %s1359 = scalar_lea.sflag [#allocation4], %s1358
          %s1360 = sand.u32 %s212, 1
          %s1361 = smul.addr %s1360, 128
          %s1362 = scalar_lea.vmem [#allocation7], %s1361
          %1364 = dma.done %s1359, 2048
        $region68: #{tpu_custom_call.1} parent=63 // pred_fallthru
          _
      $region64: #{tpu_custom_call.1} parent=5 // pred_fallthru
        _
    $region6: #{tpu_custom_call.1} parent=1 // loop_footer
      %s24 = sadd.s32 1, %s20
    $region7: #{tpu_custom_call.1} parent=1 // loop_footer_branch
      %19 = sbr.rel target = $region3
    $region8: #{tpu_custom_call.1} parent=1 // loop_exit
      _
    %1365 = vsyncpa [#allocation3], 1
    %s1366 = scalar_lea.sflag [#allocation3], 1
    %1367 = vsyncpa %s1366, 1
    %1368 = vsyncpa [#allocation6], 1
    %1369 = vsyncpa [#allocation4], 1
    %s1370 = scalar_lea.sflag [#allocation4], 1
    %1371 = vsyncpa %s1370, 1

</llo_original>
